<compile_context>
chip_gen: v5e
topology: v5e:2x2
jax: 0.10.0
libtpu: 0.0.40
codegen_flags: <defaults>
</compile_context>

<pallas_src>
import functools

import jax
import jax.numpy as jnp
import numpy as np
from jax import lax
from jax.experimental import pallas as pl
from jax.experimental.pallas import tpu as pltpu


def _rup(a, b):
    return (a + b - 1) // b * b


# ---------------------------------------------------------------------------
# Tiled linear projection: x @ W (+ bias), pipelined with an f32 accumulator
# ---------------------------------------------------------------------------

def _linear_kernel(x_ref, w_ref, b_ref, o_ref, acc_ref):
    k = pl.program_id(2)

    @pl.when(k == 0)
    def _():
        acc_ref[...] = jnp.zeros_like(acc_ref)

    acc_ref[...] += jnp.dot(x_ref[...], w_ref[...],
                            preferred_element_type=jnp.float32)

    @pl.when(k == pl.num_programs(2) - 1)
    def _():
        o_ref[...] = (acc_ref[...] + b_ref[...].astype(jnp.float32)
                      ).astype(o_ref.dtype)


def linear(x2d, w, bias=None, *, tm_max=256, tn_max=512, tk_max=512):
    """(M, K) @ (K, N) [+ bias] via a tiled, pipelined Pallas matmul."""
    M, K = x2d.shape
    K2, N = w.shape
    assert K == K2
    out_dtype = x2d.dtype

    tm = min(tm_max, _rup(M, 8))
    tk = K if K <= tk_max else tk_max
    tn = N if N <= tn_max else tn_max
    Mp, Kp, Np = _rup(M, tm), _rup(K, tk), _rup(N, tn)

    if (Mp, Kp) != (M, K):
        x2d = jnp.pad(x2d, ((0, Mp - M), (0, Kp - K)))
    if (Kp, Np) != (K, N):
        w = jnp.pad(w, ((0, Kp - K), (0, Np - N)))
    if bias is None:
        b = jnp.zeros((1, Np), out_dtype)
    else:
        b = jnp.pad(bias.reshape(1, N), ((0, 0), (0, Np - N)))

    grid = (Mp // tm, Np // tn, Kp // tk)
    out = pl.pallas_call(
        _linear_kernel,
        out_shape=jax.ShapeDtypeStruct((Mp, Np), out_dtype),
        grid=grid,
        in_specs=[
            pl.BlockSpec((tm, tk), lambda i, j, k: (i, k)),
            pl.BlockSpec((tk, tn), lambda i, j, k: (k, j)),
            pl.BlockSpec((1, tn), lambda i, j, k: (0, j)),
        ],
        out_specs=pl.BlockSpec((tm, tn), lambda i, j, k: (i, j)),
        scratch_shapes=[pltpu.VMEM((tm, tn), jnp.float32)],
        compiler_params=pltpu.CompilerParams(
            dimension_semantics=("parallel", "parallel", "arbitrary"),
            vmem_limit_bytes=32 * 1024 * 1024,
        ),
    )(x2d, w, b)
    if (Mp, Np) != (M, N):
        out = out[:M, :N]
    return out


# ---------------------------------------------------------------------------
# Attention core kernel: one (batch, q_tile) step, all heads handled inside
# ---------------------------------------------------------------------------

def _quintic_attn_kernel(q1_ref, k1_ref, q2_ref, k2_ref, v_ref, o_ref, d2_ref,
                         *, heads, dim_head):
    qi = pl.program_id(1)
    d = dim_head
    dn = (((1,), (1,)), ((), ()))  # contract dim 1 with dim 1 == q @ k^T

    # Cache dots2 = q2 @ k2^T for every head, once per batch row.
    @pl.when(qi == 0)
    def _():
        for h in range(heads):
            q2 = q2_ref[0, :, h * d:(h + 1) * d]
            k2 = k2_ref[0, :, h * d:(h + 1) * d]
            d2_ref[h] = lax.dot_general(q2, k2, dn,
                                        preferred_element_type=jnp.float32)

    # Per query tile: dots1 -> dots1 @ dots2 -> @ v, per head, lane-dense I/O.
    for h in range(heads):
        q1 = q1_ref[0, :, h * d:(h + 1) * d]
        k1 = k1_ref[0, :, h * d:(h + 1) * d]
        v = v_ref[0, :, h * d:(h + 1) * d]
        dots1 = lax.dot_general(q1, k1, dn,
                                preferred_element_type=jnp.float32)
        dots = jnp.dot(dots1, d2_ref[h], preferred_element_type=jnp.float32)
        out_h = jnp.dot(dots, v, preferred_element_type=jnp.float32)
        o_ref[0, :, h * d:(h + 1) * d] = out_h.astype(o_ref.dtype)


def quintic_attention_core(qkv, *, batch, n_pad, heads, dim_head, tq):
    """qkv: (B, n_pad, 5*inner) fused activation. Returns (B, n_pad, inner)."""
    inner = heads * dim_head
    n_qt = n_pad // tq
    kernel = functools.partial(_quintic_attn_kernel,
                               heads=heads, dim_head=dim_head)

    q_tile = (1, tq, inner)
    kv_tile = (1, n_pad, inner)

    if inner % 128 == 0:
        # Read the q1/k1/q2/k2/v column blocks directly out of the fused qkv
        # activation -- no split, no head transposes.
        operands = (qkv, qkv, qkv, qkv, qkv)
        in_specs = [
            pl.BlockSpec(q_tile, lambda b, qi: (b, qi, 0)),
            pl.BlockSpec(kv_tile, lambda b, qi: (b, 0, 1)),
            pl.BlockSpec(kv_tile, lambda b, qi: (b, 0, 2)),
            pl.BlockSpec(kv_tile, lambda b, qi: (b, 0, 3)),
            pl.BlockSpec(kv_tile, lambda b, qi: (b, 0, 4)),
        ]
    else:
        # Lane-alignment fallback: split into 5 full-width arrays (still no
        # head transposes; block last dim equals the full array dim).
        operands = tuple(jnp.split(qkv, 5, axis=-1))
        in_specs = [
            pl.BlockSpec(q_tile, lambda b, qi: (b, qi, 0)),
            pl.BlockSpec(kv_tile, lambda b, qi: (b, 0, 0)),
            pl.BlockSpec(kv_tile, lambda b, qi: (b, 0, 0)),
            pl.BlockSpec(kv_tile, lambda b, qi: (b, 0, 0)),
            pl.BlockSpec(kv_tile, lambda b, qi: (b, 0, 0)),
        ]

    # TODO(synk): for very long sequences, tile the key/value axis too
    # (flash-style) instead of caching the full (heads, n, n) dots2 in VMEM.
    return pl.pallas_call(
        kernel,
        out_shape=jax.ShapeDtypeStruct((batch, n_pad, inner), qkv.dtype),
        grid=(batch, n_qt),
        in_specs=in_specs,
        out_specs=pl.BlockSpec(q_tile, lambda b, qi: (b, qi, 0)),
        scratch_shapes=[pltpu.VMEM((heads, n_pad, n_pad), jnp.float32)],
        compiler_params=pltpu.CompilerParams(
            dimension_semantics=("parallel", "arbitrary"),
            vmem_limit_bytes=32 * 1024 * 1024,
        ),
    )(*operands)


# ---------------------------------------------------------------------------
# Module forward
# ---------------------------------------------------------------------------

def quintic_attention(x, w_qkv, w_out, b_out, heads):
    """Pallas implementation of QuinticAttetion.forward.

    x      : (B, N, dim)
    w_qkv  : (dim, 5 * heads * dim_head)   -- to_qkv (no bias)
    w_out  : (heads * dim_head, dim)       -- to_out Linear weight (x @ W)
    b_out  : (dim,)                        -- to_out Linear bias
    Dropout p=0.0 -> identity.
    """
    B, N, dim = x.shape
    inner5 = w_qkv.shape[1]
    inner = inner5 // 5
    d = inner // heads

    # qkv projection (tiled Pallas matmul, no bias).
    qkv = linear(x.reshape(B * N, dim), w_qkv).reshape(B, N, inner5)

    # Query tiling / sequence padding (zero padding is exact for this op).
    tq = min(256, _rup(N, 8))
    n_pad = _rup(N, tq)
    if n_pad != N:
        qkv = jnp.pad(qkv, ((0, 0), (0, n_pad - N), (0, 0)))

    # Attention core; output already in 'b n (h d)' layout (no transposes).
    out = quintic_attention_core(qkv, batch=B, n_pad=n_pad, heads=heads,
                                 dim_head=d, tq=tq)
    out = out[:, :N, :].reshape(B * N, inner)

    # Output projection with fused bias (tiled Pallas matmul).
    y = linear(out, w_out, bias=b_out)
    return y.reshape(B, N, dim)


# ---------------------------------------------------------------------------
# Pure-JAX reference for verification
# ---------------------------------------------------------------------------

def quintic_attention_ref(x, w_qkv, w_out, b_out, heads):
    B, N, dim = x.shape
    qkv = x @ w_qkv
    q1, k1, q2, k2, v = jnp.split(qkv, 5, axis=-1)

    def to_heads(t):
        return t.reshape(B, N, heads, -1).transpose(0, 2, 1, 3)

    q1, k1, q2, k2, v = map(to_heads, (q1, k1, q2, k2, v))
    dots1 = q1 @ jnp.swapaxes(k1, -1, -2)
    dots2 = q2 @ jnp.swapaxes(k2, -1, -2)
    dots = dots1 @ dots2
    out = dots @ v
    out = out.transpose(0, 2, 1, 3).reshape(B, N, -1)
    return out @ w_out + b_out


# ---------------------------------------------------------------------------

if __name__ == "__main__":
    # Module defaults: heads=8, dim_head=64 -> inner = 512 (lane-aligned).
    B, N, dim = 2, 8, 64
    heads, dim_head = 8, 64
    inner = heads * dim_head

    key = jax.random.PRNGKey(0)
    kx, kq, ko, kb = jax.random.split(key, 4)

    x = jax.random.normal(kx, (B, N, dim), dtype=jnp.float32)
    w_qkv = 0.05 * jax.random.normal(kq, (dim, inner * 5), dtype=jnp.float32)
    w_out = 0.05 * jax.random.normal(ko, (inner, dim), dtype=jnp.float32)
    b_out = 0.05 * jax.random.normal(kb, (dim,), dtype=jnp.float32)

    out = quintic_attention(x, w_qkv, w_out, b_out, heads)
    out = jax.block_until_ready(out)

    with jax.default_matmul_precision("float32"):
        ref = quintic_attention_ref(x, w_qkv, w_out, b_out, heads)
    np.testing.assert_allclose(np.asarray(out), np.asarray(ref),
                               rtol=1e-3, atol=1e-3)

    print("KERNEL_OK")
</pallas_src>

<mosaic_0001>
module attributes {stable_mosaic.version = 11 : i64} {
  func.func @_linear_kernel(%arg0: i32, %arg1: i32, %arg2: i32, %arg3: memref<16x64xf32, #tpu.memory_space<vmem>>, %arg4: memref<64x512xf32, #tpu.memory_space<vmem>>, %arg5: memref<1x512xf32, #tpu.memory_space<vmem>>, %arg6: memref<16x512xf32, #tpu.memory_space<vmem>>, %arg7: memref<16x512xf32, #tpu.memory_space<vmem>>) attributes {dimension_semantics = [#tpu.dimension_semantics<parallel>, #tpu.dimension_semantics<parallel>, #tpu.dimension_semantics<arbitrary>], iteration_bounds = array<i64: 1, 5, 1>, scalar_prefetch = 0 : i64, scratch_operands = 1 : i64, tpu.core_type = #tpu.core_type<tc>, window_params = [{transform_indices = @transform_0, window_bounds = array<i64: 16, 64>}, {transform_indices = @transform_1, window_bounds = array<i64: 64, 512>}, {transform_indices = @transform_2, window_bounds = array<i64: 1, 512>}, {transform_indices = @transform_3, window_bounds = array<i64: 16, 512>}]} {
    %c0_i32 = arith.constant 0 : i32
    %0 = arith.cmpi eq, %arg2, %c0_i32 : i32
    %1 = arith.extui %0 : i1 to i32
    %c0_i32_0 = arith.constant 0 : i32
    %2 = arith.cmpi ne, %1, %c0_i32_0 : i32
    scf.if %2 {
      %cst_10 = arith.constant 0.000000e+00 : f32
      %12 = vector.broadcast %cst_10 : f32 to vector<16x512xf32>
      %c0_11 = arith.constant 0 : index
      %c0_12 = arith.constant 0 : index
      %13 = vector.load %arg7[%c0_11, %c0_12] : memref<16x512xf32, #tpu.memory_space<vmem>>, vector<16x512xf32>
      tpu.vector_store %arg7[%c0_11, %c0_12], %12 {strides = array<i32>} : memref<16x512xf32, #tpu.memory_space<vmem>>, vector<16x512xf32>,
    } else {
    }
    %c0 = arith.constant 0 : index
    %c0_1 = arith.constant 0 : index
    %3 = vector.load %arg7[%c0, %c0_1] : memref<16x512xf32, #tpu.memory_space<vmem>>, vector<16x512xf32>
    %c0_2 = arith.constant 0 : index
    %c0_3 = arith.constant 0 : index
    %4 = vector.load %arg3[%c0_2, %c0_3] : memref<16x64xf32, #tpu.memory_space<vmem>>, vector<16x64xf32>
    %c0_4 = arith.constant 0 : index
    %c0_5 = arith.constant 0 : index
    %5 = vector.load %arg4[%c0_4, %c0_5] : memref<64x512xf32, #tpu.memory_space<vmem>>, vector<64x512xf32>
    %cst = arith.constant dense<0.000000e+00> : vector<16x512xf32>
    %6 = tpu.matmul %4, %5, %cst {dimension_numbers = #tpu.dot_dimension_numbers<[1], [0], [0], [1], [0, 0, 1, 1], [], []>} : vector<16x64xf32>, vector<64x512xf32>, vector<16x512xf32> -> vector<16x512xf32>
    %7 = arith.addf %3, %6 : vector<16x512xf32>
    %c0_6 = arith.constant 0 : index
    %c0_7 = arith.constant 0 : index
    %8 = vector.load %arg7[%c0_6, %c0_7] : memref<16x512xf32, #tpu.memory_space<vmem>>, vector<16x512xf32>
    tpu.vector_store %arg7[%c0_6, %c0_7], %7 {strides = array<i32>} : memref<16x512xf32, #tpu.memory_space<vmem>>, vector<16x512xf32>,
    %c0_i32_8 = arith.constant 0 : i32
    %9 = arith.cmpi eq, %arg2, %c0_i32_8 : i32
    %10 = arith.extui %9 : i1 to i32
    %c0_i32_9 = arith.constant 0 : i32
    %11 = arith.cmpi ne, %10, %c0_i32_9 : i32
    scf.if %11 {
      %c0_10 = arith.constant 0 : index
      %c0_11 = arith.constant 0 : index
      %12 = vector.load %arg7[%c0_10, %c0_11] : memref<16x512xf32, #tpu.memory_space<vmem>>, vector<16x512xf32>
      %c0_12 = arith.constant 0 : index
      %c0_13 = arith.constant 0 : index
      %13 = vector.load %arg5[%c0_12, %c0_13] : memref<1x512xf32, #tpu.memory_space<vmem>>, vector<1x512xf32>
      %14 = vector.broadcast %13 : vector<1x512xf32> to vector<16x512xf32>
      %15 = arith.addf %12, %14 : vector<16x512xf32>
      %c0_14 = arith.constant 0 : index
      %c0_15 = arith.constant 0 : index
      %16 = vector.load %arg6[%c0_14, %c0_15] : memref<16x512xf32, #tpu.memory_space<vmem>>, vector<16x512xf32>
      tpu.vector_store %arg6[%c0_14, %c0_15], %15 {strides = array<i32>} : memref<16x512xf32, #tpu.memory_space<vmem>>, vector<16x512xf32>,
    } else {
    }
    return
  }
  func.func @transform_0(%arg0: i32, %arg1: i32, %arg2: i32) -> (i32, i32) {
    %c0_i32 = arith.constant 0 : i32
    return %arg0, %arg2 : i32, i32
  }
  func.func @transform_1(%arg0: i32, %arg1: i32, %arg2: i32) -> (i32, i32) {
    %c0_i32 = arith.constant 0 : i32
    return %arg2, %arg1 : i32, i32
  }
  func.func @transform_2(%arg0: i32, %arg1: i32, %arg2: i32) -> (i32, i32) {
    %c0_i32 = arith.constant 0 : i32
    %c0_i32_0 = arith.constant 0 : i32
    return %c0_i32, %arg1 : i32, i32
  }
  func.func @transform_3(%arg0: i32, %arg1: i32, %arg2: i32) -> (i32, i32) {
    %c0_i32 = arith.constant 0 : i32
    return %arg0, %arg1 : i32, i32
  }
}

</mosaic_0001>

<llo_original>
// kernel: tpu_custom_call.1
$region0: #{tpu_custom_call.1}
  #allocation0 [shape = 'u32[]', space=smem, size = 0x4, offset = 0x4, fixed_abs, tag = 'smem constant byte address 0x4 - core index']
  #allocation1 [shape = 'u32[72,128]{1,0:T(1,128)}', space=vmem, size = 0x9000, scoped, tag = 'internal scratch']
  #allocation2 [shape = 'f32[16,512]{1,0:T(8,128)}', space=vmem, size = 0x8000, scoped, tag = 'scratch operand']
  %s0 = inlined_call_operand.hbm [shape: f32[16,64], index: 0, kind: input, shape index: {}]
  %s1 = inlined_call_operand.hbm [shape: f32[64,2560], index: 1, kind: input, shape index: {}]
  %s2 = inlined_call_operand.hbm [shape: f32[1,2560], index: 2, kind: input, shape index: {}]
  %s3 = inlined_call_operand.hbm [shape: f32[16,2560], index: 3, kind: output, shape index: {}]
  %s4 = sld [smem:[#allocation0]]
  $region65: #{tpu_custom_call.1} parent=0
    _
  %s6 = ssub.s32 1, %s4
  %s7 = scalar_select 0, %s6, %s4
  $region1: #{tpu_custom_call.1} parent=0
    #allocation3 [shape = 'u8[8192]{0}', space=vmem, size = 0x2000, scoped, tag = 'input window, operand 0, single buffered']
    #allocation4 [shape = 's32[2]{0}', space=sflag, size = 0x8, scoped, tag = 'scoped memory for tpu_custom_call.1']
    #allocation5 [shape = 's32[2]{0}', space=sflag, size = 0x8, scoped, tag = 'scoped memory for tpu_custom_call.1']
    #allocation6 [shape = 'u8[262144]{0}', space=vmem, size = 0x40000, scoped, tag = 'input window, operand 1']
    #allocation7 [shape = 's32[2]{0}', space=sflag, size = 0x8, scoped, tag = 'scoped memory for tpu_custom_call.1']
    #allocation8 [shape = 'u8[4096]{0}', space=vmem, size = 0x1000, scoped, tag = 'input window, operand 2']
    #allocation9 [shape = 'u8[65536]{0}', space=vmem, size = 0x10000, scoped, tag = 'output window, operand 0']
    %8 = vsyncpa [#allocation4], 0
    %9 = vsyncpa [#allocation7], 0
    %s10 = scalar_lea.sflag [#allocation7], 1
    %11 = vsyncpa %s10, 0
    %12 = vsyncpa [#allocation5], 0
    %s13 = scalar_lea.sflag [#allocation5], 1
    %14 = vsyncpa %s13, 0
    loop: start=0, step=1, limit=7
    $region2: #{tpu_custom_call.1} parent=1 // loop_pre_header
      _
    $region3: #{tpu_custom_call.1} parent=1 // loop_header
      %s16 = sphi 0, %s20
      %p17 = scmp.ge.s32.totalorder %s16, 7
      %s23 = sphi 0, %s42
      %s24 = sphi 0, %s38
      %s25 = sphi 0, %s34
      %s26 = sphi 0, %s23
      %s27 = sphi 0, %s24
      %s28 = sphi 0, %s25
      %s29 = sphi 0, %s26
      %s30 = sphi 0, %s27
      %s31 = sphi 0, %s28
      %s47 = sphi 0, %s49
      %s50 = sphi 0, %s47
      %s51 = sphi 0, %s50
      %s67 = sphi 0, %s51
      %s75 = sphi 0, %s77
      %s78 = sphi 0, %s75
      %s79 = sphi 0, %s78
      %s95 = sphi 0, %s79
      %s101 = sphi 0, %s103
      %s104 = sphi 0, %s101
      %s105 = sphi 0, %s104
      %s121 = sphi 0, %s105
      %s129 = sphi 0, %s131
      %s132 = sphi 0, %s129
      %s133 = sphi 0, %s132
      %s149 = sphi 0, %s133
    $region4: #{tpu_custom_call.1} parent=1 // loop_header_branch
      %19 = sbr.rel (%p17) target = $region8
    $region5: #{tpu_custom_call.1} parent=1 // loop_body
      %s21 = ssub.s32 %s16, 1
      %s22 = ssub.s32 %s16, 2
      %s32 = sadd.s32 1, %s25
      %p33 = scmp.ge.s32.totalorder %s32, 1
      %s34 = scalar_select %p33, 0, %s32
      %s35 = sadd.s32 1, %s24
      %s36 = scalar_select %p33, %s35, %s24
      %p37 = scmp.ge.s32.totalorder %s36, 5
      %s38 = scalar_select %p37, 0, %s36
      %s39 = sadd.s32 1, %s23
      %s40 = scalar_select %p37, %s39, %s23
      %p41 = scmp.ge.s32.totalorder %s40, 1
      %s42 = scalar_select %p41, 0, %s40
      %s43 = ssub.s32 %s23, %s42
      %s44 = ssub.s32 %s25, %s34
      %s45 = sor.u32 %s43, %s44
      %p46 = scmp.eq.s32.totalorder %s45, 0
      %s48 = sadd.s32 %s47, 1
      %s49 = scalar_select %p46, %s47, %s48
      %p52 = pneg %p46
      %p53 = scmp.eq.s32.totalorder %s16, 4
      %p54 = por %p52, %p53
      %p55 = scmp.ne.s32.totalorder %s47, %s50
      %p56 = scmp.eq.s32.totalorder %s16, 0
      %p57 = por %p55, %p56
      %p58 = scmp.ne.s32.totalorder %s47, %s50
      %p59 = scmp.eq.s32.totalorder %s21, 4
      %p60 = por %p58, %p59
      %p61 = scmp.ne.s32.totalorder %s50, %s51
      %p62 = scmp.eq.s32.totalorder %s21, 0
      %p63 = por %p61, %p62
      %p64 = scmp.ne.s32.totalorder %s50, %s51
      %p65 = scmp.eq.s32.totalorder %s22, 4
      %p66 = por %p64, %p65
      %p68 = scmp.ne.s32.totalorder %s51, %s67
      %p69 = scmp.eq.s32.totalorder %s22, 0
      %p70 = por %p68, %p69
      %s71 = ssub.s32 %s25, %s34
      %s72 = ssub.s32 %s24, %s38
      %s73 = sor.u32 %s71, %s72
      %p74 = scmp.eq.s32.totalorder %s73, 0
      %s76 = sadd.s32 %s75, 1
      %s77 = scalar_select %p74, %s75, %s76
      %p80 = pneg %p74
      %p81 = scmp.eq.s32.totalorder %s16, 4
      %p82 = por %p80, %p81
      %p83 = scmp.ne.s32.totalorder %s75, %s78
      %p84 = scmp.eq.s32.totalorder %s16, 0
      %p85 = por %p83, %p84
      %p86 = scmp.ne.s32.totalorder %s75, %s78
      %p87 = scmp.eq.s32.totalorder %s21, 4
      %p88 = por %p86, %p87
      %p89 = scmp.ne.s32.totalorder %s78, %s79
      %p90 = scmp.eq.s32.totalorder %s21, 0
      %p91 = por %p89, %p90
      %p92 = scmp.ne.s32.totalorder %s78, %s79
      %p93 = scmp.eq.s32.totalorder %s22, 4
      %p94 = por %p92, %p93
      %p96 = scmp.ne.s32.totalorder %s79, %s95
      %p97 = scmp.eq.s32.totalorder %s22, 0
      %p98 = por %p96, %p97
      %s99 = ssub.s32 %s24, %s38
      %p100 = scmp.eq.s32.totalorder %s99, 0
      %s102 = sadd.s32 %s101, 1
      %s103 = scalar_select %p100, %s101, %s102
      %p106 = pneg %p100
      %p107 = scmp.eq.s32.totalorder %s16, 4
      %p108 = por %p106, %p107
      %p109 = scmp.ne.s32.totalorder %s101, %s104
      %p110 = scmp.eq.s32.totalorder %s16, 0
      %p111 = por %p109, %p110
      %p112 = scmp.ne.s32.totalorder %s101, %s104
      %p113 = scmp.eq.s32.totalorder %s21, 4
      %p114 = por %p112, %p113
      %p115 = scmp.ne.s32.totalorder %s104, %s105
      %p116 = scmp.eq.s32.totalorder %s21, 0
      %p117 = por %p115, %p116
      %p118 = scmp.ne.s32.totalorder %s104, %s105
      %p119 = scmp.eq.s32.totalorder %s22, 4
      %p120 = por %p118, %p119
      %p122 = scmp.ne.s32.totalorder %s105, %s121
      %p123 = scmp.eq.s32.totalorder %s22, 0
      %p124 = por %p122, %p123
      %s125 = ssub.s32 %s23, %s42
      %s126 = ssub.s32 %s24, %s38
      %s127 = sor.u32 %s125, %s126
      %p128 = scmp.eq.s32.totalorder %s127, 0
      %s130 = sadd.s32 %s129, 1
      %s131 = scalar_select %p128, %s129, %s130
      %p134 = pneg %p128
      %p135 = scmp.eq.s32.totalorder %s16, 4
      %p136 = por %p134, %p135
      %p137 = scmp.ne.s32.totalorder %s129, %s132
      %p138 = scmp.eq.s32.totalorder %s16, 0
      %p139 = por %p137, %p138
      %p140 = scmp.ne.s32.totalorder %s129, %s132
      %p141 = scmp.eq.s32.totalorder %s21, 4
      %p142 = por %p140, %p141
      %p143 = scmp.ne.s32.totalorder %s132, %s133
      %p144 = scmp.eq.s32.totalorder %s21, 0
      %p145 = por %p143, %p144
      %p146 = scmp.ne.s32.totalorder %s132, %s133
      %p147 = scmp.eq.s32.totalorder %s22, 4
      %p148 = por %p146, %p147
      %p150 = scmp.ne.s32.totalorder %s133, %s149
      %p151 = scmp.eq.s32.totalorder %s22, 0
      %p152 = por %p150, %p151
      %p153 = scmp.le.s32.totalorder 1, %s16
      %p154 = scmp.lt.s32.totalorder %s16, 6
      %p155 = pnand %p153, %p154
      %p156 = pneg %p155
      // Predicated region
      $region9: #{tpu_custom_call.1} parent=5 // pred_check
        _
      $region10: #{tpu_custom_call.1} parent=5 // pred_check_branch
        %158 = sbr.rel (%p155) target = $region12
      $region11: #{tpu_custom_call.1} parent=5 // pred_region
        %s159 = ssub.s32 %s16, 1
        // Predicated region
        $region13: #{tpu_custom_call.1} parent=11 // pred_check
          %p160 = pneg %p63
        $region14: #{tpu_custom_call.1} parent=11 // pred_check_branch
          %162 = sbr.rel (%p160) target = $region16
        $region15: #{tpu_custom_call.1} parent=11 // pred_region
          %s163 = smul.u32 2, %s26
          %165 = vsyncadd [#allocation4], 0
          %s166 = sadd.s32 %s28, %s163
          %s167 = smul.addr %s166, 8
          %s168 = scalar_lea.hbm %s0, %s167
          %s169 = sshll.u32 %s168, 4
          %s170 = int_to_ptr.hbm [resolvable:$true] %s169
          %s171 = sshll.u32 [#allocation3], 4
          %s172 = int_to_ptr.vmem [resolvable:$true] %s171
          %177 = dma.hbm_to_vmem [thread:$0]  %s170, 256, %s172, [#allocation4], 128, 128, 8
        $region16: #{tpu_custom_call.1} parent=11 // pred_fallthru
          _
      $region12: #{tpu_custom_call.1} parent=5 // pred_fallthru
        _
      %p178 = scmp.lt.s32.totalorder %s16, 5
      // Predicated region
      $region17: #{tpu_custom_call.1} parent=5 // pred_check
        %p179 = pneg %p178
      $region18: #{tpu_custom_call.1} parent=5 // pred_check_branch
        %181 = sbr.rel (%p179) target = $region20
      $region19: #{tpu_custom_call.1} parent=5 // pred_region
        // Predicated region
        $region21: #{tpu_custom_call.1} parent=19 // pred_check
          %p182 = pneg %p85
        $region22: #{tpu_custom_call.1} parent=19 // pred_check_branch
          %184 = sbr.rel (%p182) target = $region24
        $region23: #{tpu_custom_call.1} parent=19 // pred_region
          %s185 = sand.u32 %s16, 1
          %s186 = scalar_lea.sflag [#allocation7], %s185
          %s187 = sand.u32 %s75, 1
          %s188 = smul.addr %s187, 256
          %s189 = scalar_lea.vmem [#allocation6], %s188
          %s190 = smul.u32 8, %s25
          %s191 = smul.u32 4, %s24
          %193 = vsyncadd %s186, 0
          %s194 = smul.addr %s190, 20
          %s195 = sadd.s32 %s191, %s194
          %s196 = smul.addr %s195, 8
          %s197 = scalar_lea.hbm %s1, %s196
          %s198 = sshll.u32 %s197, 4
          %s199 = int_to_ptr.hbm [resolvable:$true] %s198
          %s200 = sshll.u32 %s189, 4
          %s201 = int_to_ptr.vmem [resolvable:$true] %s200
          %206 = dma.hbm_to_vmem [thread:$0]  %s199, 4096, %s201, %s186, 2560, 512, 32
        $region24: #{tpu_custom_call.1} parent=19 // pred_fallthru
          _
        // Predicated region
        $region25: #{tpu_custom_call.1} parent=19 // pred_check
          %p207 = pneg %p111
        $region26: #{tpu_custom_call.1} parent=19 // pred_check_branch
          %209 = sbr.rel (%p207) target = $region28
        $region27: #{tpu_custom_call.1} parent=19 // pred_region
          %s210 = sand.u32 %s16, 1
          %s211 = scalar_lea.sflag [#allocation7], %s210
          %s212 = sand.u32 %s101, 1
          %s213 = smul.addr %s212, 4
          %s214 = scalar_lea.vmem [#allocation8], %s213
          %s215 = smul.u32 4, %s24
          %217 = vsyncadd %s211, 0
          %s218 = scalar_lea.hbm %s2, %s215
          %s220 = sshll.u32 %s218, 4
          %s221 = int_to_ptr.hbm [resolvable:$true] %s220
          %s222 = sshll.u32 %s214, 4
          %s223 = int_to_ptr.vmem [resolvable:$true] %s222
          %225 = dma.hbm_to_vmem [thread:$0]  %s221, 64, %s223, %s211
        $region28: #{tpu_custom_call.1} parent=19 // pred_fallthru
          _
      $region20: #{tpu_custom_call.1} parent=5 // pred_fallthru
        _
      %p226 = scmp.le.s32.totalorder 1, %s16
      %p227 = scmp.lt.s32.totalorder %s16, 6
      %p228 = pnand %p226, %p227
      %p229 = pneg %p228
      // Predicated region
      $region29: #{tpu_custom_call.1} parent=5 // pred_check
        _
      $region30: #{tpu_custom_call.1} parent=5 // pred_check_branch
        %231 = sbr.rel (%p228) target = $region32
      $region31: #{tpu_custom_call.1} parent=5 // pred_region
        %s232 = ssub.s32 %s16, 1
        // Predicated region
        $region33: #{tpu_custom_call.1} parent=31 // pred_check
          %p233 = pneg %p63
        $region34: #{tpu_custom_call.1} parent=31 // pred_check_branch
          %235 = sbr.rel (%p233) target = $region36
        $region35: #{tpu_custom_call.1} parent=31 // pred_region
          %237 = dma.done [#allocation4], 256
        $region36: #{tpu_custom_call.1} parent=31 // pred_fallthru
          _
        %s238 = sand.u32 %s21, 1
        %s239 = scalar_lea.sflag [#allocation7], %s238
        %s240 = sand.u32 %s78, 1
        %s241 = smul.addr %s240, 256
        %s242 = scalar_lea.vmem [#allocation6], %s241
        // Predicated region
        $region37: #{tpu_custom_call.1} parent=31 // pred_check
          %p243 = pneg %p91
        $region38: #{tpu_custom_call.1} parent=31 // pred_check_branch
          %245 = sbr.rel (%p243) target = $region40
        $region39: #{tpu_custom_call.1} parent=31 // pred_region
          %247 = dma.done %s239, 4096
        $region40: #{tpu_custom_call.1} parent=31 // pred_fallthru
          _
        %s248 = sand.u32 %s21, 1
        %s249 = scalar_lea.sflag [#allocation7], %s248
        %s250 = sand.u32 %s104, 1
        %s251 = smul.addr %s250, 4
        %s252 = scalar_lea.vmem [#allocation8], %s251
        // Predicated region
        $region41: #{tpu_custom_call.1} parent=31 // pred_check
          %p253 = pneg %p117
        $region42: #{tpu_custom_call.1} parent=31 // pred_check_branch
          %255 = sbr.rel (%p253) target = $region44
        $region43: #{tpu_custom_call.1} parent=31 // pred_region
          %257 = dma.done %s249, 64
        $region44: #{tpu_custom_call.1} parent=31 // pred_fallthru
          _
        %p258 = pneg %p63
        %p259 = pneg %p60
        %s260 = sand.u32 %s21, 1
        %s261 = scalar_lea.sflag [#allocation7], %s260
        %s262 = sand.u32 %s78, 1
        %s263 = smul.addr %s262, 256
        %s264 = scalar_lea.vmem [#allocation6], %s263
        %p265 = pneg %p91
        %p266 = pneg %p88
        %s267 = sand.u32 %s21, 1
        %s268 = scalar_lea.sflag [#allocation7], %s267
        %s269 = sand.u32 %s104, 1
        %s270 = smul.addr %s269, 4
        %s271 = scalar_lea.vmem [#allocation8], %s270
        %p272 = pneg %p117
        %p273 = pneg %p114
        %p274 = pneg %p145
        %p275 = pneg %p142
        %s276 = sand.u32 %s132, 1
        %s277 = scalar_lea.sflag [#allocation5], %s276
        %s278 = sand.u32 %s132, 1
        %s279 = smul.addr %s278, 64
        %s280 = scalar_lea.vmem [#allocation9], %s279
        %s281 = smul.u32 2, %s26
        %s282 = smul.u32 8, %s28
        %s283 = smul.u32 4, %s27
        %s284 = smul.u32 4, %s27
        %s285 = smul.u32 2, %s26
        %s286 = smul.u32 4, %s27
        %p287 = scmp.eq.s32.totalorder %s28, 0
        // Predicated region
        $region45: #{tpu_custom_call.1} parent=31 // pred_check
          %p288 = pneg %p287
        $region46: #{tpu_custom_call.1} parent=31 // pred_check_branch
          %290 = sbr.rel (%p288) target = $region48
        $region47: #{tpu_custom_call.1} parent=31 // pred_region
          %291 = vst [vmem:[#allocation2] sm:$0xff] 0.0
          %292 = vst [vmem:[#allocation2 + $0x8] sm:$0xff] 0.0
          %293 = vst [vmem:[#allocation2 + $0x10] sm:$0xff] 0.0
          %294 = vst [vmem:[#allocation2 + $0x18] sm:$0xff] 0.0
          %295 = vst [vmem:[#allocation2 + $0x20] sm:$0xff] 0.0
          %296 = vst [vmem:[#allocation2 + $0x28] sm:$0xff] 0.0
          %297 = vst [vmem:[#allocation2 + $0x30] sm:$0xff] 0.0
          %298 = vst [vmem:[#allocation2 + $0x38] sm:$0xff] 0.0
        $region48: #{tpu_custom_call.1} parent=31 // pred_fallthru
          _
        %v299 = vld [vmem:[#allocation2] sm:$0xff]
        %v300 = vld [vmem:[#allocation2 + $0x8] sm:$0xff]
        %v301 = vld [vmem:[#allocation2 + $0x10] sm:$0xff]
        %v302 = vld [vmem:[#allocation2 + $0x18] sm:$0xff]
        %v303 = vld [vmem:[#allocation2 + $0x20] sm:$0xff]
        %v304 = vld [vmem:[#allocation2 + $0x28] sm:$0xff]
        %v305 = vld [vmem:[#allocation2 + $0x30] sm:$0xff]
        %v306 = vld [vmem:[#allocation2 + $0x38] sm:$0xff]
        %v307 = vld [vmem:[#allocation3] sm:$0xff]
        %v308 = vld [vmem:[#allocation3 + $0x8] sm:$0xff]
        %v309 = vld [vmem:[%s242] sm:$0xff]
        %v310 = vld [vmem:[%s242 + $0x8] sm:$0xff]
        %v311 = vld [vmem:[%s242 + $0x10] sm:$0xff]
        %v312 = vld [vmem:[%s242 + $0x18] sm:$0xff]
        %v313 = vld [vmem:[%s242 + $0x20] sm:$0xff]
        %v314 = vld [vmem:[%s242 + $0x28] sm:$0xff]
        %v315 = vld [vmem:[%s242 + $0x30] sm:$0xff]
        %v316 = vld [vmem:[%s242 + $0x38] sm:$0xff]
        %v317 = vld [vmem:[%s242 + $0x40] sm:$0xff]
        %v318 = vld [vmem:[%s242 + $0x48] sm:$0xff]
        %v319 = vld [vmem:[%s242 + $0x50] sm:$0xff]
        %v320 = vld [vmem:[%s242 + $0x58] sm:$0xff]
        %v321 = vld [vmem:[%s242 + $0x60] sm:$0xff]
        %v322 = vld [vmem:[%s242 + $0x68] sm:$0xff]
        %v323 = vld [vmem:[%s242 + $0x70] sm:$0xff]
        %v324 = vld [vmem:[%s242 + $0x78] sm:$0xff]
        %v325 = vld [vmem:[%s242 + $0x80] sm:$0xff]
        %v326 = vld [vmem:[%s242 + $0x88] sm:$0xff]
        %v327 = vld [vmem:[%s242 + $0x90] sm:$0xff]
        %v328 = vld [vmem:[%s242 + $0x98] sm:$0xff]
        %v329 = vld [vmem:[%s242 + $0xa0] sm:$0xff]
        %v330 = vld [vmem:[%s242 + $0xa8] sm:$0xff]
        %v331 = vld [vmem:[%s242 + $0xb0] sm:$0xff]
        %v332 = vld [vmem:[%s242 + $0xb8] sm:$0xff]
        %v333 = vld [vmem:[%s242 + $0xc0] sm:$0xff]
        %v334 = vld [vmem:[%s242 + $0xc8] sm:$0xff]
        %v335 = vld [vmem:[%s242 + $0xd0] sm:$0xff]
        %v336 = vld [vmem:[%s242 + $0xd8] sm:$0xff]
        %v337 = vld [vmem:[%s242 + $0xe0] sm:$0xff]
        %v338 = vld [vmem:[%s242 + $0xe8] sm:$0xff]
        %v339 = vld [vmem:[%s242 + $0xf0] sm:$0xff]
        %v340 = vld [vmem:[%s242 + $0xf8] sm:$0xff]
        %vm341 = vcmask 523264
        %v343 = vsel %vm341, %v307, 0
        %v346 = vsel %vm341, %v308, 0
        %348 = vmatpush.msra.mxu0 0.0
        %349 = vmatpush.msra.mxu0 0.0
        %350 = vmatpush.msra.mxu0 0.0
        %351 = vmatpush.msra.mxu0 0.0
        %352 = vmatpush.msra.mxu0 0.0
        %353 = vmatpush.msra.mxu0 0.0
        %354 = vmatpush.msra.mxu0 0.0
        %355 = vmatpush.msra.mxu0 0.0
        %356 = vmatpush.msra.mxu0 %v337
        %357 = vmatpush.msra.mxu0 %v333
        %358 = vmatpush.msra.mxu0 %v329
        %359 = vmatpush.msra.mxu0 %v325
        %360 = vmatpush.msra.mxu0 %v321
        %361 = vmatpush.msra.mxu0 %v317
        %362 = vmatpush.msra.mxu0 %v313
        %363 = vmatpush.msra.mxu0 %v309
        %364 = vmatmul.f32.gmra.mxu0 %v343
        %v365 = vpop.f32.mrf.mxu0
        %v366 = vadd.f32 0.0, %v365
        %367 = vmatmul.f32.gmra.mxu0 %v346
        %v368 = vpop.f32.mrf.mxu0
        %v369 = vadd.f32 0.0, %v368
        %370 = vdwg.mxu0
        %371 = vmatpush.msra.mxu0 0.0
        %372 = vmatpush.msra.mxu0 0.0
        %373 = vmatpush.msra.mxu0 0.0
        %374 = vmatpush.msra.mxu0 0.0
        %375 = vmatpush.msra.mxu0 0.0
        %376 = vmatpush.msra.mxu0 0.0
        %377 = vmatpush.msra.mxu0 0.0
        %378 = vmatpush.msra.mxu0 0.0
        %379 = vmatpush.msra.mxu0 %v338
        %380 = vmatpush.msra.mxu0 %v334
        %381 = vmatpush.msra.mxu0 %v330
        %382 = vmatpush.msra.mxu0 %v326
        %383 = vmatpush.msra.mxu0 %v322
        %384 = vmatpush.msra.mxu0 %v318
        %385 = vmatpush.msra.mxu0 %v314
        %386 = vmatpush.msra.mxu0 %v310
        %387 = vmatmul.f32.gmra.mxu0 %v343
        %v388 = vpop.f32.mrf.mxu0
        %v389 = vadd.f32 0.0, %v388
        %390 = vmatmul.f32.gmra.mxu0 %v346
        %v391 = vpop.f32.mrf.mxu0
        %v392 = vadd.f32 0.0, %v391
        %393 = vdwg.mxu0
        %394 = vmatpush.msra.mxu0 0.0
        %395 = vmatpush.msra.mxu0 0.0
        %396 = vmatpush.msra.mxu0 0.0
        %397 = vmatpush.msra.mxu0 0.0
        %398 = vmatpush.msra.mxu0 0.0
        %399 = vmatpush.msra.mxu0 0.0
        %400 = vmatpush.msra.mxu0 0.0
        %401 = vmatpush.msra.mxu0 0.0
        %402 = vmatpush.msra.mxu0 %v339
        %403 = vmatpush.msra.mxu0 %v335
        %404 = vmatpush.msra.mxu0 %v331
        %405 = vmatpush.msra.mxu0 %v327
        %406 = vmatpush.msra.mxu0 %v323
        %407 = vmatpush.msra.mxu0 %v319
        %408 = vmatpush.msra.mxu0 %v315
        %409 = vmatpush.msra.mxu0 %v311
        %410 = vmatmul.f32.gmra.mxu0 %v343
        %v411 = vpop.f32.mrf.mxu0
        %v412 = vadd.f32 0.0, %v411
        %413 = vmatmul.f32.gmra.mxu0 %v346
        %v414 = vpop.f32.mrf.mxu0
        %v415 = vadd.f32 0.0, %v414
        %416 = vdwg.mxu0
        %417 = vmatpush.msra.mxu0 0.0
        %418 = vmatpush.msra.mxu0 0.0
        %419 = vmatpush.msra.mxu0 0.0
        %420 = vmatpush.msra.mxu0 0.0
        %421 = vmatpush.msra.mxu0 0.0
        %422 = vmatpush.msra.mxu0 0.0
        %423 = vmatpush.msra.mxu0 0.0
        %424 = vmatpush.msra.mxu0 0.0
        %425 = vmatpush.msra.mxu0 %v340
        %426 = vmatpush.msra.mxu0 %v336
        %427 = vmatpush.msra.mxu0 %v332
        %428 = vmatpush.msra.mxu0 %v328
        %429 = vmatpush.msra.mxu0 %v324
        %430 = vmatpush.msra.mxu0 %v320
        %431 = vmatpush.msra.mxu0 %v316
        %432 = vmatpush.msra.mxu0 %v312
        %433 = vmatmul.f32.gmra.mxu0 %v343
        %v434 = vpop.f32.mrf.mxu0
        %v435 = vadd.f32 0.0, %v434
        %436 = vmatmul.f32.gmra.mxu0 %v346
        %v437 = vpop.f32.mrf.mxu0
        %v438 = vadd.f32 0.0, %v437
        %439 = vdwg.mxu0
        %v440 = vadd.f32 %v299, %v366
        %v441 = vadd.f32 %v300, %v389
        %v442 = vadd.f32 %v301, %v412
        %v443 = vadd.f32 %v302, %v435
        %v444 = vadd.f32 %v303, %v369
        %v445 = vadd.f32 %v304, %v392
        %v446 = vadd.f32 %v305, %v415
        %v447 = vadd.f32 %v306, %v438
        %448 = vst [vmem:[#allocation2] sm:$0xff] %v440
        %449 = vst [vmem:[#allocation2 + $0x8] sm:$0xff] %v441
        %450 = vst [vmem:[#allocation2 + $0x10] sm:$0xff] %v442
        %451 = vst [vmem:[#allocation2 + $0x18] sm:$0xff] %v443
        %452 = vst [vmem:[#allocation2 + $0x20] sm:$0xff] %v444
        %453 = vst [vmem:[#allocation2 + $0x28] sm:$0xff] %v445
        %454 = vst [vmem:[#allocation2 + $0x30] sm:$0xff] %v446
        %455 = vst [vmem:[#allocation2 + $0x38] sm:$0xff] %v447
        // Predicated region
        $region49: #{tpu_custom_call.1} parent=31 // pred_check
          %p456 = pneg %p287
        $region50: #{tpu_custom_call.1} parent=31 // pred_check_branch
          %458 = sbr.rel (%p456) target = $region52
        $region51: #{tpu_custom_call.1} parent=31 // pred_region
          %v459 = vld [vmem:[#allocation2] sm:$0xff]
          %v460 = vld [vmem:[#allocation2 + $0x8] sm:$0xff]
          %v461 = vld [vmem:[#allocation2 + $0x10] sm:$0xff]
          %v462 = vld [vmem:[#allocation2 + $0x18] sm:$0xff]
          %v463 = vld [vmem:[#allocation2 + $0x20] sm:$0xff]
          %v464 = vld [vmem:[#allocation2 + $0x28] sm:$0xff]
          %v465 = vld [vmem:[#allocation2 + $0x30] sm:$0xff]
          %v466 = vld [vmem:[#allocation2 + $0x38] sm:$0xff]
          %v467 = vld [vmem:[%s252] sm:$0xf]
          %v469 = vperm.slane %v467, 0
          %v470 = vperm.slane %v467, 1
          %v471 = vperm.slane %v467, 2
          %v472 = vperm.slane %v467, 3
          %v477 = vadd.f32 %v459, %v469
          %v478 = vadd.f32 %v460, %v470
          %v479 = vadd.f32 %v461, %v471
          %v480 = vadd.f32 %v462, %v472
          %v481 = vadd.f32 %v463, %v469
          %v482 = vadd.f32 %v464, %v470
          %v483 = vadd.f32 %v465, %v471
          %v484 = vadd.f32 %v466, %v472
          %485 = vst [vmem:[%s280] sm:$0xff] %v477
          %486 = vst [vmem:[%s280 + $0x8] sm:$0xff] %v478
          %487 = vst [vmem:[%s280 + $0x10] sm:$0xff] %v479
          %488 = vst [vmem:[%s280 + $0x18] sm:$0xff] %v480
          %489 = vst [vmem:[%s280 + $0x20] sm:$0xff] %v481
          %490 = vst [vmem:[%s280 + $0x28] sm:$0xff] %v482
          %491 = vst [vmem:[%s280 + $0x30] sm:$0xff] %v483
          %492 = vst [vmem:[%s280 + $0x38] sm:$0xff] %v484
        $region52: #{tpu_custom_call.1} parent=31 // pred_fallthru
          _
        %s493 = sand.u32 %s132, 1
        %s494 = scalar_lea.sflag [#allocation5], %s493
        %s495 = sand.u32 %s132, 1
        %s496 = smul.addr %s495, 64
        %s497 = scalar_lea.vmem [#allocation9], %s496
        // Predicated region
        $region53: #{tpu_custom_call.1} parent=31 // pred_check
          %p498 = pneg %p142
        $region54: #{tpu_custom_call.1} parent=31 // pred_check_branch
          %500 = sbr.rel (%p498) target = $region56
        $region55: #{tpu_custom_call.1} parent=31 // pred_region
          %s501 = smul.u32 2, %s26
          %s502 = smul.u32 4, %s27
          %504 = vsyncadd %s494, 0
          %s505 = smul.addr %s501, 20
          %s506 = sadd.s32 %s502, %s505
          %s507 = smul.addr %s506, 8
          %s508 = scalar_lea.hbm %s3, %s507
          %s509 = sshll.u32 %s497, 4
          %s510 = int_to_ptr.vmem [resolvable:$true] %s509
          %s511 = sshll.u32 %s508, 4
          %s512 = int_to_ptr.hbm [resolvable:$true] %s511
          %517 = dma.vmem_to_hbm [thread:$0]  %s510, 1024, %s512, %s494, 512, 2560, 32
        $region56: #{tpu_custom_call.1} parent=31 // pred_fallthru
          _
      $region32: #{tpu_custom_call.1} parent=5 // pred_fallthru
        _
      %p518 = scmp.le.s32.totalorder 2, %s16
      // Predicated region
      $region57: #{tpu_custom_call.1} parent=5 // pred_check
        %p519 = pneg %p518
      $region58: #{tpu_custom_call.1} parent=5 // pred_check_branch
        %521 = sbr.rel (%p519) target = $region60
      $region59: #{tpu_custom_call.1} parent=5 // pred_region
        %s522 = ssub.s32 %s16, 2
        // Predicated region
        $region61: #{tpu_custom_call.1} parent=59 // pred_check
          %p523 = pneg %p148
        $region62: #{tpu_custom_call.1} parent=59 // pred_check_branch
          %525 = sbr.rel (%p523) target = $region64
        $region63: #{tpu_custom_call.1} parent=59 // pred_region
          %s526 = sand.u32 %s133, 1
          %s527 = scalar_lea.sflag [#allocation5], %s526
          %s528 = sand.u32 %s133, 1
          %s529 = smul.addr %s528, 64
          %s530 = scalar_lea.vmem [#allocation9], %s529
          %532 = dma.done %s527, 1024
        $region64: #{tpu_custom_call.1} parent=59 // pred_fallthru
          _
      $region60: #{tpu_custom_call.1} parent=5 // pred_fallthru
        _
    $region6: #{tpu_custom_call.1} parent=1 // loop_footer
      %s20 = sadd.s32 1, %s16
    $region7: #{tpu_custom_call.1} parent=1 // loop_footer_branch
      %15 = sbr.rel target = $region3
    $region8: #{tpu_custom_call.1} parent=1 // loop_exit
      _
    %533 = vsyncpa [#allocation4], 1
    %s534 = scalar_lea.sflag [#allocation4], 1
    %535 = vsyncpa %s534, 1
    %536 = vsyncpa [#allocation7], 1
    %s537 = scalar_lea.sflag [#allocation7], 1
    %538 = vsyncpa %s537, 1
    %539 = vsyncpa [#allocation5], 1
    %s540 = scalar_lea.sflag [#allocation5], 1
    %541 = vsyncpa %s540, 1

</llo_original>
